<compile_context>
chip_gen: v6e
topology: v6e:2x2x1
jax: 0.10.0
libtpu: 0.0.40
codegen_flags: <defaults>
</compile_context>

<pallas_src>
import functools

import jax
import jax.numpy as jnp
from jax.experimental import pallas as pl
from jax.experimental.pallas import tpu as pltpu


def _round_up(x, m):
    return (x + m - 1) // m * m


# --------------------------------------------------------------------------
# Fused Pallas kernel: the entire autoencoder forward in one body.
# --------------------------------------------------------------------------
def _fused_ae_kernel(*refs, layer_meta, latent_idx, n_heads):
    """refs = (x_head_0..x_head_{H-1}, w_pack, b_pack, recon_out, latent_out).

    Every layer is y = x @ W + b (BatchNorm / StandardScaler already folded
    into W, b at build time).  ReLU on every layer except the latent layer and
    the final reconstruction layer.  Weights are read with static,
    128-aligned column slices out of one packed slab; all intermediates live
    in vregs / VMEM.
    """
    x_refs = refs[:n_heads]
    w_ref = refs[n_heads]
    b_ref = refs[n_heads + 1]
    recon_ref = refs[n_heads + 2]
    lat_ref = refs[n_heads + 3]

    # Per-head inputs are concatenated in vregs (no wrapper-side HBM concat).
    h = jnp.concatenate([r[...] for r in x_refs], axis=-1)

    n_layers = len(layer_meta)
    for i, (din, dout, off) in enumerate(layer_meta):
        w = w_ref[0:din, off:off + dout]      # static slice, 128-aligned start
        b = b_ref[0:1, off:off + dout]
        h = jnp.dot(h, w, preferred_element_type=jnp.float32) + b
        if i == latent_idx:
            lat_ref[...] = h.astype(lat_ref.dtype)   # lane-dense (padded to 128)
        elif i != n_layers - 1:
            h = jnp.maximum(h, 0.0)
    recon_ref[...] = h.astype(recon_ref.dtype)


# --------------------------------------------------------------------------
# Batch tile selection.
# --------------------------------------------------------------------------
def _pick_bm(B):
    if B <= 512:
        return B  # single step; tiny/latency-bound batches
    # Large batch: tiles up to 1024 rows, and at least 2 grid steps so the
    # "parallel" batch axis shards across both v7x TensorCores.
    return min(1024, _round_up(pl.cdiv(B, 2), 128))


# --------------------------------------------------------------------------
# Wrapper: one pallas_call, batch-tiled grid, packed weights resident in VMEM.
# --------------------------------------------------------------------------
def fused_forward(xs, w_pack, b_pack, layer_meta, latent_idx):
    B = xs[0].shape[0]
    n_heads = len(xs)
    d_out = layer_meta[-1][1]
    lat_width = layer_meta[latent_idx][1]

    bm = _pick_bm(B)
    grid = (pl.cdiv(B, bm),)

    in_specs = []
    for xh in xs:
        in_specs.append(pl.BlockSpec((bm, xh.shape[1]), lambda i: (i, 0)))
    # Packed weight / bias slabs: constant index_map -> fetched once.
    in_specs.append(pl.BlockSpec(w_pack.shape, lambda i: (0, 0)))
    in_specs.append(pl.BlockSpec(b_pack.shape, lambda i: (0, 0)))

    out_specs = (
        pl.BlockSpec((bm, d_out), lambda i: (i, 0)),
        pl.BlockSpec((bm, lat_width), lambda i: (i, 0)),
    )
    out_shape = (
        jax.ShapeDtypeStruct((B, d_out), jnp.float32),
        jax.ShapeDtypeStruct((B, lat_width), jnp.float32),
    )

    # Advisory cost for XLA's scheduler.
    flops = sum(2 * B * din * dout for din, dout, _ in layer_meta)
    bytes_accessed = (
        sum(x.size * 4 for x in xs)
        + w_pack.size * 4
        + b_pack.size * 4
        + B * d_out * 4
        + B * lat_width * 4
    )
    cost = pl.CostEstimate(
        flops=flops, transcendentals=0, bytes_accessed=bytes_accessed
    )

    kernel = functools.partial(
        _fused_ae_kernel,
        layer_meta=layer_meta,
        latent_idx=latent_idx,
        n_heads=n_heads,
    )
    recon, lat = pl.pallas_call(
        kernel,
        grid=grid,
        in_specs=in_specs,
        out_specs=out_specs,
        out_shape=out_shape,
        compiler_params=pltpu.CompilerParams(
            dimension_semantics=("parallel",),
            vmem_limit_bytes=48 * 1024 * 1024,  # <= v7x 64 MiB physical VMEM
        ),
        cost_estimate=cost,
    )(*xs, w_pack, b_pack)
    return recon, lat


# --------------------------------------------------------------------------
# Deterministic parameter construction (per-head, torch-like structure).
# --------------------------------------------------------------------------
BN_EPS = 1e-5


def _make_layer(key, din, dout, *, with_bn):
    kw, kb, kg, kbe, km, kv = jax.random.split(key, 6)
    w = jax.random.normal(kw, (din, dout), jnp.float32) * (1.0 / jnp.sqrt(din))
    b = jax.random.normal(kb, (dout,), jnp.float32) * 0.01
    if with_bn:
        gamma = 1.0 + 0.1 * jax.random.normal(kg, (dout,), jnp.float32)
        beta = 0.05 * jax.random.normal(kbe, (dout,), jnp.float32)
        rmean = 0.05 * jax.random.normal(km, (dout,), jnp.float32)
        rvar = 1.0 + 0.1 * jax.nn.sigmoid(jax.random.normal(kv, (dout,), jnp.float32))
        scale = gamma / jnp.sqrt(rvar + BN_EPS)
        shift = beta - rmean * scale
    else:
        scale = jnp.ones((dout,), jnp.float32)
        shift = jnp.zeros((dout,), jnp.float32)
    return {"w": w, "b": b, "scale": scale, "shift": shift}


def _make_mlp(key, dims, *, relu_flags):
    layers = []
    for i, (din, dout) in enumerate(zip(dims[:-1], dims[1:])):
        key, sub = jax.random.split(key)
        layers.append(_make_layer(sub, din, dout, with_bn=relu_flags[i]))
    return layers


def make_params(key, input_spec, latent_dim, separated_layer, shared_layer):
    params = {"enc_sep": {}, "dec_sep": {}, "norm": {}}
    for name, dim in input_spec.items():
        key, k1, k2, k3 = jax.random.split(key, 4)
        mean = jax.random.normal(k1, (dim,), jnp.float32)
        std = 0.5 + jax.nn.sigmoid(jax.random.normal(k2, (dim,), jnp.float32))
        params["norm"][name] = {"mean": mean, "std": std}
        params["enc_sep"][name] = _make_mlp(
            k3, [dim] + separated_layer, relu_flags=[True] * len(separated_layer)
        )

    shared_in = len(input_spec) * separated_layer[-1]
    key, k4, k5, k6 = jax.random.split(key, 4)
    params["enc_shared"] = _make_mlp(
        k4, [shared_in] + shared_layer, relu_flags=[True] * len(shared_layer)
    )
    params["latent"] = _make_layer(k5, shared_layer[-1], latent_dim, with_bn=False)

    shared_dec = [latent_dim] + shared_layer[::-1]
    params["dec_shared"] = _make_mlp(
        k6, shared_dec, relu_flags=[True] * (len(shared_dec) - 1)
    )

    sep_dec = [shared_dec[-1]] + separated_layer[::-1]
    for name, dim in input_spec.items():
        key, k7 = jax.random.split(key)
        dims = sep_dec + [dim]
        flags = [True] * len(separated_layer) + [False]  # last: no BN, no act
        params["dec_sep"][name] = _make_mlp(k7, dims, relu_flags=flags)
    return params


# --------------------------------------------------------------------------
# One-time folding & packing (runs once at model build, NOT per forward call).
# --------------------------------------------------------------------------
def _fold_bn(lyr):
    w = lyr["w"] * lyr["scale"][None, :]
    b = lyr["b"] * lyr["scale"] + lyr["shift"]
    return w, b


def _block_diag(ws):
    din = sum(w.shape[0] for w in ws)
    dout = sum(w.shape[1] for w in ws)
    out = jnp.zeros((din, dout), jnp.float32)
    ri = ci = 0
    for w in ws:
        out = out.at[ri : ri + w.shape[0], ci : ci + w.shape[1]].set(w)
        ri += w.shape[0]
        ci += w.shape[1]
    return out


def build_fused_layers(params, input_spec, separated_layer):
    names = list(input_spec)
    n_sep = len(separated_layer)
    layers = []

    # ---- per-head encoders (StandardScaler pre-norm folded into layer 0) ----
    for li in range(n_sep):
        ws, bs = [], []
        for name in names:
            w, b = _fold_bn(params["enc_sep"][name][li])
            if li == 0:
                nv = params["norm"][name]
                b = b - (nv["mean"] / nv["std"]) @ w
                w = w / nv["std"][:, None]
            ws.append(w)
            bs.append(b)
        layers.append((_block_diag(ws), jnp.concatenate(bs)))

    # ---- shared encoder ----
    for lyr in params["enc_shared"]:
        layers.append(_fold_bn(lyr))

    # ---- latent (no BN / act; scale=1, shift=0 so fold is identity) ----
    latent_idx = len(layers)
    layers.append(_fold_bn(params["latent"]))

    # ---- shared decoder ----
    for lyr in params["dec_shared"]:
        layers.append(_fold_bn(lyr))

    # ---- per-head decoders (denormalize folded into the last layer) ----
    for li in range(n_sep + 1):
        ws, bs = [], []
        for name in names:
            w, b = _fold_bn(params["dec_sep"][name][li])
            if li == n_sep:
                nv = params["norm"][name]
                w = w * nv["std"][None, :]
                b = b * nv["std"] + nv["mean"]
            ws.append(w)
            bs.append(b)
        merged_w = jnp.concatenate(ws, axis=1) if li == 0 else _block_diag(ws)
        layers.append((merged_w, jnp.concatenate(bs)))

    # ---- lane-dense latent output: pad latent columns to a multiple of 128
    #      and the next layer's rows to match (exact: padded entries are 0). --
    w_lat, b_lat = layers[latent_idx]
    lat_dim = w_lat.shape[1]
    pad = _round_up(lat_dim, 128) - lat_dim
    if pad > 0:
        layers[latent_idx] = (
            jnp.pad(w_lat, ((0, 0), (0, pad))),
            jnp.pad(b_lat, (0, pad)),
        )
        w_n, b_n = layers[latent_idx + 1]
        layers[latent_idx + 1] = (jnp.pad(w_n, ((0, pad), (0, 0))), b_n)

    return layers, latent_idx


def pack_layers(fused_layers):
    """Pack all (W, b) into one weight slab and one bias slab.

    Column offsets are 128-aligned so every in-kernel slice starts on a lane
    tile boundary.  Returns (w_pack (R, C), b_pack (1, C), meta) where
    meta[i] = (din, dout, col_offset).
    """
    max_din = max(int(w.shape[0]) for w, _ in fused_layers)
    R = _round_up(max_din, 8)
    offs, C = [], 0
    for w, _ in fused_layers:
        offs.append(C)
        C += _round_up(int(w.shape[1]), 128)

    w_pack = jnp.zeros((R, C), jnp.float32)
    b_pack = jnp.zeros((1, C), jnp.float32)
    meta = []
    for (w, b), off in zip(fused_layers, offs):
        din, dout = int(w.shape[0]), int(w.shape[1])
        w_pack = w_pack.at[:din, off : off + dout].set(w)
        b_pack = b_pack.at[0, off : off + dout].set(b)
        meta.append((din, dout, off))
    return w_pack, b_pack, tuple(meta)


# --------------------------------------------------------------------------
# Model build: fold + pack once, return a jitted forward.
# --------------------------------------------------------------------------
def build_model(params, input_spec, separated_layer, latent_dim):
    names = tuple(input_spec)
    head_dims = tuple(int(input_spec[n]) for n in names)

    fused_layers, latent_idx = build_fused_layers(params, input_spec, separated_layer)
    w_pack, b_pack, meta = pack_layers(fused_layers)

    def _forward(w_pack, b_pack, x):
        xs = [x[n] for n in names]
        recon_slab, lat_pad = fused_forward(xs, w_pack, b_pack, meta, latent_idx)
        lat = lat_pad[:, :latent_dim]
        recon, off = {}, 0
        for n, d in zip(names, head_dims):
            recon[n] = recon_slab[:, off : off + d]
            off += d
        out = dict(x)
        out.update({"reconstruction": recon, "latent_layer": lat})
        return out

    return jax.jit(_forward), (w_pack, b_pack)


# --------------------------------------------------------------------------
# Pure-JAX reference (unfused, same math) for the correctness check.
# --------------------------------------------------------------------------
def forward_ref(params, x, input_spec, separated_layer):
    def lin(h, lyr, relu):
        y = (h @ lyr["w"] + lyr["b"]) * lyr["scale"] + lyr["shift"]
        return jnp.maximum(y, 0.0) if relu else y

    n_sep = len(separated_layer)
    enc = []
    for name in input_spec:
        nv = params["norm"][name]
        h = (x[name] - nv["mean"]) / nv["std"]
        for lyr in params["enc_sep"][name]:
            h = lin(h, lyr, True)
        enc.append(h)
    h = jnp.concatenate(enc, axis=1)
    for lyr in params["enc_shared"]:
        h = lin(h, lyr, True)
    lat = lin(h, params["latent"], False)
    h = lat
    for lyr in params["dec_shared"]:
        h = lin(h, lyr, True)
    recon = {}
    for name in input_spec:
        d = h
        for lyr in params["dec_sep"][name][:n_sep]:
            d = lin(d, lyr, True)
        d = lin(d, params["dec_sep"][name][n_sep], False)
        nv = params["norm"][name]
        recon[name] = d * nv["std"] + nv["mean"]
    return recon, lat


# --------------------------------------------------------------------------
if __name__ == "__main__":
    # Small configuration consistent with the module defaults (scaled down).
    input_spec = {"Welch_X": 64, "Welch_Y": 64, "Welch_Z": 64}
    latent_dim = 8
    separated_layer = [32, 16]
    shared_layer = [32, 16]
    batch = 4

    key = jax.random.PRNGKey(0)
    key, kp = jax.random.split(key)
    params = make_params(kp, input_spec, latent_dim, separated_layer, shared_layer)

    # Fold / pack ONCE; forward_fn is the steady-state (jitted, 1 pallas_call).
    forward_fn, (w_pack, b_pack) = build_model(
        params, input_spec, separated_layer, latent_dim
    )

    x = {}
    for name, dim in input_spec.items():
        key, kx = jax.random.split(key)
        x[name] = jax.random.normal(kx, (batch, dim), jnp.float32)

    out = forward_fn(w_pack, b_pack, x)
    out = jax.tree_util.tree_map(jax.block_until_ready, out)

    recon_ref, lat_ref = forward_ref(params, x, input_spec, separated_layer)
    assert out["latent_layer"].shape == (batch, latent_dim)
    assert jnp.allclose(out["latent_layer"], lat_ref, atol=1e-3, rtol=1e-3)
    for name in input_spec:
        assert out["reconstruction"][name].shape == (batch, input_spec[name])
        assert jnp.allclose(
            out["reconstruction"][name], recon_ref[name], atol=1e-3, rtol=1e-3
        )

    print("KERNEL_OK")
</pallas_src>

<mosaic_0001>
module attributes {stable_mosaic.version = 11 : i64} {
  func.func @_fused_ae_kernel(%arg0: i32, %arg1: memref<4x64xf32, #tpu.memory_space<vmem>>, %arg2: memref<4x64xf32, #tpu.memory_space<vmem>>, %arg3: memref<4x64xf32, #tpu.memory_space<vmem>>, %arg4: memref<192x1408xf32, #tpu.memory_space<vmem>>, %arg5: memref<1x1408xf32, #tpu.memory_space<vmem>>, %arg6: memref<4x192xf32, #tpu.memory_space<vmem>>, %arg7: memref<4x128xf32, #tpu.memory_space<vmem>>) attributes {dimension_semantics = [#tpu.dimension_semantics<parallel>], iteration_bounds = array<i64: 1>, scalar_prefetch = 0 : i64, scratch_operands = 0 : i64, tpu.core_type = #tpu.core_type<tc>, window_params = [{transform_indices = @transform_0, window_bounds = array<i64: 4, 64>}, {transform_indices = @transform_1, window_bounds = array<i64: 4, 64>}, {transform_indices = @transform_2, window_bounds = array<i64: 4, 64>}, {pipeline_mode = #tpu.pipeline_mode<synchronous>, transform_indices = @transform_3, window_bounds = array<i64: 192, 1408>}, {pipeline_mode = #tpu.pipeline_mode<synchronous>, transform_indices = @transform_4, window_bounds = array<i64: 1, 1408>}, {transform_indices = @transform_5, window_bounds = array<i64: 4, 192>}, {transform_indices = @transform_6, window_bounds = array<i64: 4, 128>}]} {
    %c0 = arith.constant 0 : index
    %c0_0 = arith.constant 0 : index
    %0 = vector.load %arg1[%c0, %c0_0] : memref<4x64xf32, #tpu.memory_space<vmem>>, vector<4x64xf32>
    %c0_1 = arith.constant 0 : index
    %c0_2 = arith.constant 0 : index
    %1 = vector.load %arg2[%c0_1, %c0_2] : memref<4x64xf32, #tpu.memory_space<vmem>>, vector<4x64xf32>
    %c0_3 = arith.constant 0 : index
    %c0_4 = arith.constant 0 : index
    %2 = vector.load %arg3[%c0_3, %c0_4] : memref<4x64xf32, #tpu.memory_space<vmem>>, vector<4x64xf32>
    %3 = tpu.concatenate %0, %1, %2 in 1 : vector<4x64xf32>, vector<4x64xf32>, vector<4x64xf32> -> vector<4x192xf32>
    %c0_5 = arith.constant 0 : index
    %c0_6 = arith.constant 0 : index
    %4 = vector.load %arg4[%c0_5, %c0_6] : memref<192x1408xf32, #tpu.memory_space<vmem>>, vector<192x96xf32>
    %c0_7 = arith.constant 0 : index
    %c0_8 = arith.constant 0 : index
    %5 = vector.load %arg5[%c0_7, %c0_8] : memref<1x1408xf32, #tpu.memory_space<vmem>>, vector<1x96xf32>
    %cst = arith.constant dense<0.000000e+00> : vector<4x96xf32>
    %6 = tpu.matmul %3, %4, %cst {dimension_numbers = #tpu.dot_dimension_numbers<[1], [0], [0], [1], [0, 0, 1, 1], [], []>} : vector<4x192xf32>, vector<192x96xf32>, vector<4x96xf32> -> vector<4x96xf32>
    %7 = vector.broadcast %5 : vector<1x96xf32> to vector<4x96xf32>
    %8 = arith.addf %6, %7 : vector<4x96xf32>
    %cst_9 = arith.constant 0.000000e+00 : f32
    %9 = vector.broadcast %cst_9 : f32 to vector<4x96xf32>
    %10 = arith.maximumf %8, %9 : vector<4x96xf32>
    %c0_10 = arith.constant 0 : index
    %c128 = arith.constant 128 : index
    %11 = vector.load %arg4[%c0_10, %c128] : memref<192x1408xf32, #tpu.memory_space<vmem>>, vector<96x48xf32>
    %c0_11 = arith.constant 0 : index
    %c128_12 = arith.constant 128 : index
    %12 = vector.load %arg5[%c0_11, %c128_12] : memref<1x1408xf32, #tpu.memory_space<vmem>>, vector<1x48xf32>
    %cst_13 = arith.constant dense<0.000000e+00> : vector<4x48xf32>
    %13 = tpu.matmul %10, %11, %cst_13 {dimension_numbers = #tpu.dot_dimension_numbers<[1], [0], [0], [1], [0, 0, 1, 1], [], []>} : vector<4x96xf32>, vector<96x48xf32>, vector<4x48xf32> -> vector<4x48xf32>
    %14 = vector.broadcast %12 : vector<1x48xf32> to vector<4x48xf32>
    %15 = arith.addf %13, %14 : vector<4x48xf32>
    %cst_14 = arith.constant 0.000000e+00 : f32
    %16 = vector.broadcast %cst_14 : f32 to vector<4x48xf32>
    %17 = arith.maximumf %15, %16 : vector<4x48xf32>
    %c0_15 = arith.constant 0 : index
    %c256 = arith.constant 256 : index
    %18 = vector.load %arg4[%c0_15, %c256] : memref<192x1408xf32, #tpu.memory_space<vmem>>, vector<48x32xf32>
    %c0_16 = arith.constant 0 : index
    %c256_17 = arith.constant 256 : index
    %19 = vector.load %arg5[%c0_16, %c256_17] : memref<1x1408xf32, #tpu.memory_space<vmem>>, vector<1x32xf32>
    %cst_18 = arith.constant dense<0.000000e+00> : vector<4x32xf32>
    %20 = tpu.matmul %17, %18, %cst_18 {dimension_numbers = #tpu.dot_dimension_numbers<[1], [0], [0], [1], [0, 0, 1, 1], [], []>} : vector<4x48xf32>, vector<48x32xf32>, vector<4x32xf32> -> vector<4x32xf32>
    %21 = vector.broadcast %19 : vector<1x32xf32> to vector<4x32xf32>
    %22 = arith.addf %20, %21 : vector<4x32xf32>
    %cst_19 = arith.constant 0.000000e+00 : f32
    %23 = vector.broadcast %cst_19 : f32 to vector<4x32xf32>
    %24 = arith.maximumf %22, %23 : vector<4x32xf32>
    %c0_20 = arith.constant 0 : index
    %c384 = arith.constant 384 : index
    %25 = vector.load %arg4[%c0_20, %c384] : memref<192x1408xf32, #tpu.memory_space<vmem>>, vector<32x16xf32>
    %c0_21 = arith.constant 0 : index
    %c384_22 = arith.constant 384 : index
    %26 = vector.load %arg5[%c0_21, %c384_22] : memref<1x1408xf32, #tpu.memory_space<vmem>>, vector<1x16xf32>
    %cst_23 = arith.constant dense<0.000000e+00> : vector<4x16xf32>
    %27 = tpu.matmul %24, %25, %cst_23 {dimension_numbers = #tpu.dot_dimension_numbers<[1], [0], [0], [1], [0, 0, 1, 1], [], []>} : vector<4x32xf32>, vector<32x16xf32>, vector<4x16xf32> -> vector<4x16xf32>
    %28 = vector.broadcast %26 : vector<1x16xf32> to vector<4x16xf32>
    %29 = arith.addf %27, %28 : vector<4x16xf32>
    %cst_24 = arith.constant 0.000000e+00 : f32
    %30 = vector.broadcast %cst_24 : f32 to vector<4x16xf32>
    %31 = arith.maximumf %29, %30 : vector<4x16xf32>
    %c0_25 = arith.constant 0 : index
    %c512 = arith.constant 512 : index
    %32 = vector.load %arg4[%c0_25, %c512] : memref<192x1408xf32, #tpu.memory_space<vmem>>, vector<16x128xf32>
    %c0_26 = arith.constant 0 : index
    %c512_27 = arith.constant 512 : index
    %33 = vector.load %arg5[%c0_26, %c512_27] : memref<1x1408xf32, #tpu.memory_space<vmem>>, vector<1x128xf32>
    %cst_28 = arith.constant dense<0.000000e+00> : vector<4x128xf32>
    %34 = tpu.matmul %31, %32, %cst_28 {dimension_numbers = #tpu.dot_dimension_numbers<[1], [0], [0], [1], [0, 0, 1, 1], [], []>} : vector<4x16xf32>, vector<16x128xf32>, vector<4x128xf32> -> vector<4x128xf32>
    %35 = vector.broadcast %33 : vector<1x128xf32> to vector<4x128xf32>
    %36 = arith.addf %34, %35 : vector<4x128xf32>
    %c0_29 = arith.constant 0 : index
    %c0_30 = arith.constant 0 : index
    %37 = vector.load %arg7[%c0_29, %c0_30] : memref<4x128xf32, #tpu.memory_space<vmem>>, vector<4x128xf32>
    tpu.vector_store %arg7[%c0_29, %c0_30], %36 {strides = array<i32>} : memref<4x128xf32, #tpu.memory_space<vmem>>, vector<4x128xf32>,
    %c0_31 = arith.constant 0 : index
    %c640 = arith.constant 640 : index
    %38 = vector.load %arg4[%c0_31, %c640] : memref<192x1408xf32, #tpu.memory_space<vmem>>, vector<128x16xf32>
    %c0_32 = arith.constant 0 : index
    %c640_33 = arith.constant 640 : index
    %39 = vector.load %arg5[%c0_32, %c640_33] : memref<1x1408xf32, #tpu.memory_space<vmem>>, vector<1x16xf32>
    %cst_34 = arith.constant dense<0.000000e+00> : vector<4x16xf32>
    %40 = tpu.matmul %36, %38, %cst_34 {dimension_numbers = #tpu.dot_dimension_numbers<[1], [0], [0], [1], [0, 0, 1, 1], [], []>} : vector<4x128xf32>, vector<128x16xf32>, vector<4x16xf32> -> vector<4x16xf32>
    %41 = vector.broadcast %39 : vector<1x16xf32> to vector<4x16xf32>
    %42 = arith.addf %40, %41 : vector<4x16xf32>
    %cst_35 = arith.constant 0.000000e+00 : f32
    %43 = vector.broadcast %cst_35 : f32 to vector<4x16xf32>
    %44 = arith.maximumf %42, %43 : vector<4x16xf32>
    %c0_36 = arith.constant 0 : index
    %c768 = arith.constant 768 : index
    %45 = vector.load %arg4[%c0_36, %c768] : memref<192x1408xf32, #tpu.memory_space<vmem>>, vector<16x32xf32>
    %c0_37 = arith.constant 0 : index
    %c768_38 = arith.constant 768 : index
    %46 = vector.load %arg5[%c0_37, %c768_38] : memref<1x1408xf32, #tpu.memory_space<vmem>>, vector<1x32xf32>
    %cst_39 = arith.constant dense<0.000000e+00> : vector<4x32xf32>
    %47 = tpu.matmul %44, %45, %cst_39 {dimension_numbers = #tpu.dot_dimension_numbers<[1], [0], [0], [1], [0, 0, 1, 1], [], []>} : vector<4x16xf32>, vector<16x32xf32>, vector<4x32xf32> -> vector<4x32xf32>
    %48 = vector.broadcast %46 : vector<1x32xf32> to vector<4x32xf32>
    %49 = arith.addf %47, %48 : vector<4x32xf32>
    %cst_40 = arith.constant 0.000000e+00 : f32
    %50 = vector.broadcast %cst_40 : f32 to vector<4x32xf32>
    %51 = arith.maximumf %49, %50 : vector<4x32xf32>
    %c0_41 = arith.constant 0 : index
    %c896 = arith.constant 896 : index
    %52 = vector.load %arg4[%c0_41, %c896] : memref<192x1408xf32, #tpu.memory_space<vmem>>, vector<32x48xf32>
    %c0_42 = arith.constant 0 : index
    %c896_43 = arith.constant 896 : index
    %53 = vector.load %arg5[%c0_42, %c896_43] : memref<1x1408xf32, #tpu.memory_space<vmem>>, vector<1x48xf32>
    %cst_44 = arith.constant dense<0.000000e+00> : vector<4x48xf32>
    %54 = tpu.matmul %51, %52, %cst_44 {dimension_numbers = #tpu.dot_dimension_numbers<[1], [0], [0], [1], [0, 0, 1, 1], [], []>} : vector<4x32xf32>, vector<32x48xf32>, vector<4x48xf32> -> vector<4x48xf32>
    %55 = vector.broadcast %53 : vector<1x48xf32> to vector<4x48xf32>
    %56 = arith.addf %54, %55 : vector<4x48xf32>
    %cst_45 = arith.constant 0.000000e+00 : f32
    %57 = vector.broadcast %cst_45 : f32 to vector<4x48xf32>
    %58 = arith.maximumf %56, %57 : vector<4x48xf32>
    %c0_46 = arith.constant 0 : index
    %c1024 = arith.constant 1024 : index
    %59 = vector.load %arg4[%c0_46, %c1024] : memref<192x1408xf32, #tpu.memory_space<vmem>>, vector<48x96xf32>
    %c0_47 = arith.constant 0 : index
    %c1024_48 = arith.constant 1024 : index
    %60 = vector.load %arg5[%c0_47, %c1024_48] : memref<1x1408xf32, #tpu.memory_space<vmem>>, vector<1x96xf32>
    %cst_49 = arith.constant dense<0.000000e+00> : vector<4x96xf32>
    %61 = tpu.matmul %58, %59, %cst_49 {dimension_numbers = #tpu.dot_dimension_numbers<[1], [0], [0], [1], [0, 0, 1, 1], [], []>} : vector<4x48xf32>, vector<48x96xf32>, vector<4x96xf32> -> vector<4x96xf32>
    %62 = vector.broadcast %60 : vector<1x96xf32> to vector<4x96xf32>
    %63 = arith.addf %61, %62 : vector<4x96xf32>
    %cst_50 = arith.constant 0.000000e+00 : f32
    %64 = vector.broadcast %cst_50 : f32 to vector<4x96xf32>
    %65 = arith.maximumf %63, %64 : vector<4x96xf32>
    %c0_51 = arith.constant 0 : index
    %c1152 = arith.constant 1152 : index
    %66 = vector.load %arg4[%c0_51, %c1152] : memref<192x1408xf32, #tpu.memory_space<vmem>>, vector<96x192xf32>
    %c0_52 = arith.constant 0 : index
    %c1152_53 = arith.constant 1152 : index
    %67 = vector.load %arg5[%c0_52, %c1152_53] : memref<1x1408xf32, #tpu.memory_space<vmem>>, vector<1x192xf32>
    %cst_54 = arith.constant dense<0.000000e+00> : vector<4x192xf32>
    %68 = tpu.matmul %65, %66, %cst_54 {dimension_numbers = #tpu.dot_dimension_numbers<[1], [0], [0], [1], [0, 0, 1, 1], [], []>} : vector<4x96xf32>, vector<96x192xf32>, vector<4x192xf32> -> vector<4x192xf32>
    %69 = vector.broadcast %67 : vector<1x192xf32> to vector<4x192xf32>
    %70 = arith.addf %68, %69 : vector<4x192xf32>
    %c0_55 = arith.constant 0 : index
    %c0_56 = arith.constant 0 : index
    %71 = vector.load %arg6[%c0_55, %c0_56] : memref<4x192xf32, #tpu.memory_space<vmem>>, vector<4x192xf32>
    tpu.vector_store %arg6[%c0_55, %c0_56], %70 {strides = array<i32>} : memref<4x192xf32, #tpu.memory_space<vmem>>, vector<4x192xf32>,
    return
  }
  func.func @transform_0(%arg0: i32) -> (i32, i32) {
    %c0_i32 = arith.constant 0 : i32
    %c0_i32_0 = arith.constant 0 : i32
    return %arg0, %c0_i32 : i32, i32
  }
  func.func @transform_1(%arg0: i32) -> (i32, i32) {
    %c0_i32 = arith.constant 0 : i32
    %c0_i32_0 = arith.constant 0 : i32
    return %arg0, %c0_i32 : i32, i32
  }
  func.func @transform_2(%arg0: i32) -> (i32, i32) {
    %c0_i32 = arith.constant 0 : i32
    %c0_i32_0 = arith.constant 0 : i32
    return %arg0, %c0_i32 : i32, i32
  }
  func.func @transform_3(%arg0: i32) -> (i32, i32) {
    %c0_i32 = arith.constant 0 : i32
    %c0_i32_0 = arith.constant 0 : i32
    %c0_i32_1 = arith.constant 0 : i32
    return %c0_i32, %c0_i32_0 : i32, i32
  }
  func.func @transform_4(%arg0: i32) -> (i32, i32) {
    %c0_i32 = arith.constant 0 : i32
    %c0_i32_0 = arith.constant 0 : i32
    %c0_i32_1 = arith.constant 0 : i32
    return %c0_i32, %c0_i32_0 : i32, i32
  }
  func.func @transform_5(%arg0: i32) -> (i32, i32) {
    %c0_i32 = arith.constant 0 : i32
    %c0_i32_0 = arith.constant 0 : i32
    return %arg0, %c0_i32 : i32, i32
  }
  func.func @transform_6(%arg0: i32) -> (i32, i32) {
    %c0_i32 = arith.constant 0 : i32
    %c0_i32_0 = arith.constant 0 : i32
    return %arg0, %c0_i32 : i32, i32
  }
}

</mosaic_0001>

<llo_original>
// kernel: _forward.1
$region0: #{_forward.1}
  #allocation0 [shape = 'u32[]', space=smem, size = 0x4, offset = 0x4, fixed_abs, tag = 'smem constant byte address 0x4 - core index']
  #allocation1 [shape = 'u32[144,128]{1,0:T(1,128)}', space=vmem, size = 0x12000, scoped, tag = 'internal scratch']
  %s0 = inlined_call_operand.hbm [shape: f32[4,64], index: 0, kind: input, shape index: {}]
  %s1 = inlined_call_operand.hbm [shape: f32[4,64], index: 1, kind: input, shape index: {}]
  %s2 = inlined_call_operand.hbm [shape: f32[4,64], index: 2, kind: input, shape index: {}]
  %s3 = inlined_call_operand.hbm [shape: f32[192,1408], index: 3, kind: input, shape index: {}]
  %s4 = inlined_call_operand.hbm [shape: f32[1,1408], index: 4, kind: input, shape index: {}]
  %s5 = inlined_call_operand.vmem [shape: f32[4,192], index: 5, kind: output, shape index: {0}]
  %s6 = inlined_call_operand.hbm [shape: f32[4,128], index: 6, kind: output, shape index: {1}]
  %7 = xla_tuple %s5, %s6
  %s8 = sld [smem:[#allocation0]]
  $region58: #{_forward.1} parent=0
    _
  %s10 = ssub.s32 1, %s8
  %s11 = scalar_select 0, %s10, %s8
  $region1: #{_forward.1} parent=0
    #allocation2 [shape = 'u8[2048]{0}', space=vmem, size = 0x800, scoped, tag = 'input window, operand 0, single buffered']
    #allocation3 [shape = 's32[1]{0}', space=sflag, size = 0x4, scoped, tag = 'scoped memory for _forward.1']
    #allocation4 [shape = 's32[1]{0}', space=sflag, size = 0x4, scoped, tag = 'scoped memory for _forward.1']
    #allocation5 [shape = 'u8[2048]{0}', space=vmem, size = 0x800, scoped, tag = 'input window, operand 1, single buffered']
    #allocation6 [shape = 's32[1]{0}', space=sflag, size = 0x4, scoped, tag = 'scoped memory for _forward.1']
    #allocation7 [shape = 'u8[2048]{0}', space=vmem, size = 0x800, scoped, tag = 'input window, operand 2, single buffered']
    #allocation8 [shape = 'u8[1081344]{0}', space=vmem, size = 0x108000, scoped, tag = 'input window, operand 3, single buffered']
    #allocation9 [shape = 's32[1]{0}', space=sflag, size = 0x4, scoped, tag = 'scoped memory for _forward.1']
    #allocation10 [shape = 'u8[5632]{0}', space=vmem, size = 0x1800, scoped, tag = 'input window, operand 4, single buffered']
    #allocation11 [shape = 'u8[2048]{0}', space=vmem, size = 0x800, scoped, tag = 'output window, operand 1, single buffered']
    %12 = vsyncpa [#allocation3], 0
    %13 = vsyncpa [#allocation6], 0
    %14 = vsyncpa [#allocation9], 0
    %15 = vsyncpa [#allocation4], 0
    // Predicated region
    $region2: #{_forward.1} parent=1 // pred_check
      _
    $region3: #{_forward.1} parent=1 // pred_check_branch
      %17 = sbr.rel (0) target = $region5
    $region4: #{_forward.1} parent=1 // pred_region
      %s19 = ssub.s32 64, 64
      %20 = vsyncadd [#allocation3], %s19
      %s22 = sshll.u32 [#allocation2], 4
      %s23 = int_to_ptr.vmem [resolvable:$true] %s22
      %25 = dma.hbm_to_vmem [thread:$0]  %s0, 64, %s23, [#allocation3]
    $region5: #{_forward.1} parent=1 // pred_fallthru
      _
    // Predicated region
    $region6: #{_forward.1} parent=1 // pred_check
      _
    $region7: #{_forward.1} parent=1 // pred_check_branch
      %27 = sbr.rel (0) target = $region9
    $region8: #{_forward.1} parent=1 // pred_region
      %s29 = ssub.s32 64, 64
      %30 = vsyncadd [#allocation6], %s29
      %s32 = sshll.u32 [#allocation5], 4
      %s33 = int_to_ptr.vmem [resolvable:$true] %s32
      %35 = dma.hbm_to_vmem [thread:$0]  %s1, 64, %s33, [#allocation6]
    $region9: #{_forward.1} parent=1 // pred_fallthru
      _
    // Predicated region
    $region10: #{_forward.1} parent=1 // pred_check
      _
    $region11: #{_forward.1} parent=1 // pred_check_branch
      %37 = sbr.rel (0) target = $region13
    $region12: #{_forward.1} parent=1 // pred_region
      %s39 = ssub.s32 64, 64
      %40 = vsyncadd [#allocation6], %s39
      %s42 = sshll.u32 [#allocation7], 4
      %s43 = int_to_ptr.vmem [resolvable:$true] %s42
      %45 = dma.hbm_to_vmem [thread:$0]  %s2, 64, %s43, [#allocation6]
    $region13: #{_forward.1} parent=1 // pred_fallthru
      _
    // Predicated region
    $region14: #{_forward.1} parent=1 // pred_check
      _
    $region15: #{_forward.1} parent=1 // pred_check_branch
      %47 = sbr.rel (0) target = $region17
    $region16: #{_forward.1} parent=1 // pred_region
      %s49 = ssub.s32 33792, 33792
      %50 = vsyncadd [#allocation9], %s49
      %s51 = sshll.u32 [#allocation8], 4
      %s52 = int_to_ptr.vmem [resolvable:$true] %s51
      %57 = dma.hbm_to_vmem [thread:$0]  %s3, 33792, %s52, [#allocation9], 1408, 1408, 88
    $region17: #{_forward.1} parent=1 // pred_fallthru
      _
    // Predicated region
    $region18: #{_forward.1} parent=1 // pred_check
      _
    $region19: #{_forward.1} parent=1 // pred_check_branch
      %59 = sbr.rel (0) target = $region21
    $region20: #{_forward.1} parent=1 // pred_region
      %s61 = ssub.s32 176, 176
      %62 = vsyncadd [#allocation9], %s61
      %s64 = sshll.u32 [#allocation10], 4
      %s65 = int_to_ptr.vmem [resolvable:$true] %s64
      %67 = dma.hbm_to_vmem [thread:$0]  %s4, 176, %s65, [#allocation9]
    $region21: #{_forward.1} parent=1 // pred_fallthru
      _
    // Predicated region
    $region22: #{_forward.1} parent=1 // pred_check
      _
    $region23: #{_forward.1} parent=1 // pred_check_branch
      %69 = sbr.rel (0) target = $region25
    $region24: #{_forward.1} parent=1 // pred_region
      %70 = dma.done [#allocation3], 64
    $region25: #{_forward.1} parent=1 // pred_fallthru
      _
    // Predicated region
    $region26: #{_forward.1} parent=1 // pred_check
      _
    $region27: #{_forward.1} parent=1 // pred_check_branch
      %72 = sbr.rel (0) target = $region29
    $region28: #{_forward.1} parent=1 // pred_region
      %73 = dma.done [#allocation6], 64
    $region29: #{_forward.1} parent=1 // pred_fallthru
      _
    // Predicated region
    $region30: #{_forward.1} parent=1 // pred_check
      _
    $region31: #{_forward.1} parent=1 // pred_check_branch
      %75 = sbr.rel (0) target = $region33
    $region32: #{_forward.1} parent=1 // pred_region
      %76 = dma.done [#allocation6], 64
    $region33: #{_forward.1} parent=1 // pred_fallthru
      _
    // Predicated region
    $region34: #{_forward.1} parent=1 // pred_check
      _
    $region35: #{_forward.1} parent=1 // pred_check_branch
      %78 = sbr.rel (0) target = $region37
    $region36: #{_forward.1} parent=1 // pred_region
      %79 = dma.done [#allocation9], 33792
    $region37: #{_forward.1} parent=1 // pred_fallthru
      _
    // Predicated region
    $region38: #{_forward.1} parent=1 // pred_check
      _
    $region39: #{_forward.1} parent=1 // pred_check_branch
      %81 = sbr.rel (0) target = $region41
    $region40: #{_forward.1} parent=1 // pred_region
      %82 = dma.done [#allocation9], 176
    $region41: #{_forward.1} parent=1 // pred_fallthru
      _
    %v83 = vld [vmem:[#allocation2] sm:$0xf]
    %v84 = vld [vmem:[#allocation5] sm:$0xf]
    %v85 = vld [vmem:[#allocation7] sm:$0xf]
    %87 = vrot.lane.b32.xlu0 %v84, 64
    %v88 = vpop.permute.xlu0 %87
    %vm90 = vcmask 523264
    %v91 = vsel %vm90, %v83, %v88
    %v92 = vld [vmem:[#allocation8] sm:$0xff]
    %v93 = vld [vmem:[#allocation8 + $0x58] sm:$0xff]
    %v94 = vld [vmem:[#allocation8 + $0xb0] sm:$0xff]
    %v95 = vld [vmem:[#allocation8 + $0x108] sm:$0xff]
    %v96 = vld [vmem:[#allocation8 + $0x160] sm:$0xff]
    %v97 = vld [vmem:[#allocation8 + $0x1b8] sm:$0xff]
    %v98 = vld [vmem:[#allocation8 + $0x210] sm:$0xff]
    %v99 = vld [vmem:[#allocation8 + $0x268] sm:$0xff]
    %v100 = vld [vmem:[#allocation8 + $0x2c0] sm:$0xff]
    %v101 = vld [vmem:[#allocation8 + $0x318] sm:$0xff]
    %v102 = vld [vmem:[#allocation8 + $0x370] sm:$0xff]
    %v103 = vld [vmem:[#allocation8 + $0x3c8] sm:$0xff]
    %v104 = vld [vmem:[#allocation8 + $0x420] sm:$0xff]
    %v105 = vld [vmem:[#allocation8 + $0x478] sm:$0xff]
    %v106 = vld [vmem:[#allocation8 + $0x4d0] sm:$0xff]
    %v107 = vld [vmem:[#allocation8 + $0x528] sm:$0xff]
    %v108 = vld [vmem:[#allocation8 + $0x580] sm:$0xff]
    %v109 = vld [vmem:[#allocation8 + $0x5d8] sm:$0xff]
    %v110 = vld [vmem:[#allocation8 + $0x630] sm:$0xff]
    %v111 = vld [vmem:[#allocation8 + $0x688] sm:$0xff]
    %v112 = vld [vmem:[#allocation8 + $0x6e0] sm:$0xff]
    %v113 = vld [vmem:[#allocation8 + $0x738] sm:$0xff]
    %v114 = vld [vmem:[#allocation8 + $0x790] sm:$0xff]
    %v115 = vld [vmem:[#allocation8 + $0x7e8] sm:$0xff]
    %v116 = vld [vmem:[#allocation10] sm:$0x1]
    %v118 = vlaneseq
    %v119 = vshrl.u32 %v118, 7
    %v120 = vsub.s32 0, %v119
    %v121 = vrot.slane %v116, %v120
    %v124 = vsel %vm90, %v85, 0
    %126 = vmatprep.subr.mxu0 0.0
    %127 = vmatpush1.msra.mxu0 %v107
    %128 = vmatprep.subr.mxu0 0.0
    %129 = vmatpush1.msra.mxu0 %v106
    %130 = vmatprep.subr.mxu0 0.0
    %131 = vmatpush1.msra.mxu0 %v105
    %132 = vmatprep.subr.mxu0 0.0
    %133 = vmatpush1.msra.mxu0 %v104
    %134 = vmatprep.subr.mxu0 0.0
    %135 = vmatpush1.msra.mxu0 %v103
    %136 = vmatprep.subr.mxu0 0.0
    %137 = vmatpush1.msra.mxu0 %v102
    %138 = vmatprep.subr.mxu0 0.0
    %139 = vmatpush1.msra.mxu0 %v101
    %140 = vmatprep.subr.mxu0 0.0
    %141 = vmatpush1.msra.mxu0 %v100
    %142 = vmatprep.subr.mxu0 0.0
    %143 = vmatpush1.msra.mxu0 %v99
    %144 = vmatprep.subr.mxu0 0.0
    %145 = vmatpush1.msra.mxu0 %v98
    %146 = vmatprep.subr.mxu0 0.0
    %147 = vmatpush1.msra.mxu0 %v97
    %148 = vmatprep.subr.mxu0 0.0
    %149 = vmatpush1.msra.mxu0 %v96
    %150 = vmatprep.subr.mxu0 0.0
    %151 = vmatpush1.msra.mxu0 %v95
    %152 = vmatprep.subr.mxu0 0.0
    %153 = vmatpush1.msra.mxu0 %v94
    %154 = vmatprep.subr.mxu0 0.0
    %155 = vmatpush1.msra.mxu0 %v93
    %156 = vmatprep.subr.mxu0 0.0
    %157 = vmatpush1.msra.mxu0 %v92
    %158 = vmatprep.subr.mxu0 0.0
    %159 = vmatpush2.msra.mxu0 0.0
    %160 = vmatprep.subr.mxu0 0.0
    %161 = vmatpush2.msra.mxu0 0.0
    %162 = vmatprep.subr.mxu0 0.0
    %163 = vmatpush2.msra.mxu0 0.0
    %164 = vmatprep.subr.mxu0 0.0
    %165 = vmatpush2.msra.mxu0 0.0
    %166 = vmatprep.subr.mxu0 0.0
    %167 = vmatpush2.msra.mxu0 0.0
    %168 = vmatprep.subr.mxu0 0.0
    %169 = vmatpush2.msra.mxu0 0.0
    %170 = vmatprep.subr.mxu0 0.0
    %171 = vmatpush2.msra.mxu0 0.0
    %172 = vmatprep.subr.mxu0 0.0
    %173 = vmatpush2.msra.mxu0 0.0
    %174 = vmatprep.subr.mxu0 0.0
    %175 = vmatpush2.msra.mxu0 %v115
    %176 = vmatprep.subr.mxu0 0.0
    %177 = vmatpush2.msra.mxu0 %v114
    %178 = vmatprep.subr.mxu0 0.0
    %179 = vmatpush2.msra.mxu0 %v113
    %180 = vmatprep.subr.mxu0 0.0
    %181 = vmatpush2.msra.mxu0 %v112
    %182 = vmatprep.subr.mxu0 0.0
    %183 = vmatpush2.msra.mxu0 %v111
    %184 = vmatprep.subr.mxu0 0.0
    %185 = vmatpush2.msra.mxu0 %v110
    %186 = vmatprep.subr.mxu0 0.0
    %187 = vmatpush2.msra.mxu0 %v109
    %188 = vmatprep.subr.mxu0 0.0
    %189 = vmatpush2.msra.mxu0 %v108
    %190 = vmatprep.mubr.f32.mxu0 %v124
    %191 = vmatmul.mubr.f32.gmra.mxu0 %v91
    %v192 = vpop.f32.mrf.mxu0
    %v193 = vadd.f32 %v121, %v192
    %v194 = vpop.f32.mrf.mxu0
    %195 = vdwg.mxu0
    %v196 = vmax.f32 %v193, 0.0
    %v197 = vld [vmem:[#allocation8 + $0x8] sm:$0xff]
    %v198 = vld [vmem:[#allocation8 + $0x60] sm:$0xff]
    %v199 = vld [vmem:[#allocation8 + $0xb8] sm:$0xff]
    %v200 = vld [vmem:[#allocation8 + $0x110] sm:$0xff]
    %v201 = vld [vmem:[#allocation8 + $0x168] sm:$0xff]
    %v202 = vld [vmem:[#allocation8 + $0x1c0] sm:$0xff]
    %v203 = vld [vmem:[#allocation8 + $0x218] sm:$0xff]
    %v204 = vld [vmem:[#allocation8 + $0x270] sm:$0xff]
    %v205 = vld [vmem:[#allocation8 + $0x2c8] sm:$0xff]
    %v206 = vld [vmem:[#allocation8 + $0x320] sm:$0xff]
    %v207 = vld [vmem:[#allocation8 + $0x378] sm:$0xff]
    %v208 = vld [vmem:[#allocation8 + $0x3d0] sm:$0xff]
    %v209 = vld [vmem:[#allocation10 + $0x1] sm:$0x1]
    %v211 = vlaneseq
    %v212 = vshrl.u32 %v211, 7
    %v213 = vsub.s32 0, %v212
    %v214 = vrot.slane %v209, %v213
    %vm216 = vcmask 785408
    %v218 = vsel %vm216, %v196, 0
    %220 = vmatprep.subr.mxu0 0.0
    %221 = vmatpush1.msra.mxu0 0.0
    %222 = vmatprep.subr.mxu0 0.0
    %223 = vmatpush1.msra.mxu0 0.0
    %224 = vmatprep.subr.mxu0 0.0
    %225 = vmatpush1.msra.mxu0 0.0
    %226 = vmatprep.subr.mxu0 0.0
    %227 = vmatpush1.msra.mxu0 0.0
    %228 = vmatprep.subr.mxu0 0.0
    %229 = vmatpush1.msra.mxu0 %v208
    %230 = vmatprep.subr.mxu0 0.0
    %231 = vmatpush1.msra.mxu0 %v207
    %232 = vmatprep.subr.mxu0 0.0
    %233 = vmatpush1.msra.mxu0 %v206
    %234 = vmatprep.subr.mxu0 0.0
    %235 = vmatpush1.msra.mxu0 %v205
    %236 = vmatprep.subr.mxu0 0.0
    %237 = vmatpush1.msra.mxu0 %v204
    %238 = vmatprep.subr.mxu0 0.0
    %239 = vmatpush1.msra.mxu0 %v203
    %240 = vmatprep.subr.mxu0 0.0
    %241 = vmatpush1.msra.mxu0 %v202
    %242 = vmatprep.subr.mxu0 0.0
    %243 = vmatpush1.msra.mxu0 %v201
    %244 = vmatprep.subr.mxu0 0.0
    %245 = vmatpush1.msra.mxu0 %v200
    %246 = vmatprep.subr.mxu0 0.0
    %247 = vmatpush1.msra.mxu0 %v199
    %248 = vmatprep.subr.mxu0 0.0
    %249 = vmatpush1.msra.mxu0 %v198
    %250 = vmatprep.subr.mxu0 0.0
    %251 = vmatpush1.msra.mxu0 %v197
    %252 = vmatprep.subr.mxu0 0.0
    %253 = vmatpush2.msra.mxu0 0.0
    %254 = vmatprep.subr.mxu0 0.0
    %255 = vmatpush2.msra.mxu0 0.0
    %256 = vmatprep.subr.mxu0 0.0
    %257 = vmatpush2.msra.mxu0 0.0
    %258 = vmatprep.subr.mxu0 0.0
    %259 = vmatpush2.msra.mxu0 0.0
    %260 = vmatprep.subr.mxu0 0.0
    %261 = vmatpush2.msra.mxu0 0.0
    %262 = vmatprep.subr.mxu0 0.0
    %263 = vmatpush2.msra.mxu0 0.0
    %264 = vmatprep.subr.mxu0 0.0
    %265 = vmatpush2.msra.mxu0 0.0
    %266 = vmatprep.subr.mxu0 0.0
    %267 = vmatpush2.msra.mxu0 0.0
    %268 = vmatprep.subr.mxu0 0.0
    %269 = vmatpush2.msra.mxu0 0.0
    %270 = vmatprep.subr.mxu0 0.0
    %271 = vmatpush2.msra.mxu0 0.0
    %272 = vmatprep.subr.mxu0 0.0
    %273 = vmatpush2.msra.mxu0 0.0
    %274 = vmatprep.subr.mxu0 0.0
    %275 = vmatpush2.msra.mxu0 0.0
    %276 = vmatprep.subr.mxu0 0.0
    %277 = vmatpush2.msra.mxu0 0.0
    %278 = vmatprep.subr.mxu0 0.0
    %279 = vmatpush2.msra.mxu0 0.0
    %280 = vmatprep.subr.mxu0 0.0
    %281 = vmatpush2.msra.mxu0 0.0
    %282 = vmatprep.subr.mxu0 0.0
    %283 = vmatpush2.msra.mxu0 0.0
    %284 = vmatprep.mubr.f32.mxu0 0.0
    %285 = vmatmul.mubr.f32.gmra.mxu0 %v218
    %v286 = vpop.f32.mrf.mxu0
    %v287 = vadd.f32 %v214, %v286
    %v288 = vpop.f32.mrf.mxu0
    %289 = vdwg.mxu0
    %v290 = vmax.f32 %v287, 0.0
    %v291 = vld [vmem:[#allocation8 + $0x10] sm:$0xff]
    %v292 = vld [vmem:[#allocation8 + $0x68] sm:$0xff]
    %v293 = vld [vmem:[#allocation8 + $0xc0] sm:$0xff]
    %v294 = vld [vmem:[#allocation8 + $0x118] sm:$0xff]
    %v295 = vld [vmem:[#allocation8 + $0x170] sm:$0xff]
    %v296 = vld [vmem:[#allocation8 + $0x1c8] sm:$0xff]
    %v297 = vld [vmem:[#allocation10 + $0x2] sm:$0x1]
    %v299 = vlaneseq
    %v300 = vshrl.u32 %v299, 7
    %v301 = vsub.s32 0, %v300
    %v302 = vrot.slane %v297, %v301
    %vm304 = vcmask 392192
    %v306 = vsel %vm304, %v290, 0
    %308 = vmatprep.subr.mxu0 0.0
    %309 = vmatpush1.msra.mxu0 0.0
    %310 = vmatprep.subr.mxu0 0.0
    %311 = vmatpush1.msra.mxu0 0.0
    %312 = vmatprep.subr.mxu0 0.0
    %313 = vmatpush1.msra.mxu0 0.0
    %314 = vmatprep.subr.mxu0 0.0
    %315 = vmatpush1.msra.mxu0 0.0
    %316 = vmatprep.subr.mxu0 0.0
    %317 = vmatpush1.msra.mxu0 0.0
    %318 = vmatprep.subr.mxu0 0.0
    %319 = vmatpush1.msra.mxu0 0.0
    %320 = vmatprep.subr.mxu0 0.0
    %321 = vmatpush1.msra.mxu0 0.0
    %322 = vmatprep.subr.mxu0 0.0
    %323 = vmatpush1.msra.mxu0 0.0
    %324 = vmatprep.subr.mxu0 0.0
    %325 = vmatpush1.msra.mxu0 0.0
    %326 = vmatprep.subr.mxu0 0.0
    %327 = vmatpush1.msra.mxu0 0.0
    %328 = vmatprep.subr.mxu0 0.0
    %329 = vmatpush1.msra.mxu0 %v296
    %330 = vmatprep.subr.mxu0 0.0
    %331 = vmatpush1.msra.mxu0 %v295
    %332 = vmatprep.subr.mxu0 0.0
    %333 = vmatpush1.msra.mxu0 %v294
    %334 = vmatprep.subr.mxu0 0.0
    %335 = vmatpush1.msra.mxu0 %v293
    %336 = vmatprep.subr.mxu0 0.0
    %337 = vmatpush1.msra.mxu0 %v292
    %338 = vmatprep.subr.mxu0 0.0
    %339 = vmatpush1.msra.mxu0 %v291
    %340 = vmatprep.subr.mxu0 0.0
    %341 = vmatpush2.msra.mxu0 0.0
    %342 = vmatprep.subr.mxu0 0.0
    %343 = vmatpush2.msra.mxu0 0.0
    %344 = vmatprep.subr.mxu0 0.0
    %345 = vmatpush2.msra.mxu0 0.0
    %346 = vmatprep.subr.mxu0 0.0
    %347 = vmatpush2.msra.mxu0 0.0
    %348 = vmatprep.subr.mxu0 0.0
    %349 = vmatpush2.msra.mxu0 0.0
    %350 = vmatprep.subr.mxu0 0.0
    %351 = vmatpush2.msra.mxu0 0.0
    %352 = vmatprep.subr.mxu0 0.0
    %353 = vmatpush2.msra.mxu0 0.0
    %354 = vmatprep.subr.mxu0 0.0
    %355 = vmatpush2.msra.mxu0 0.0
    %356 = vmatprep.subr.mxu0 0.0
    %357 = vmatpush2.msra.mxu0 0.0
    %358 = vmatprep.subr.mxu0 0.0
    %359 = vmatpush2.msra.mxu0 0.0
    %360 = vmatprep.subr.mxu0 0.0
    %361 = vmatpush2.msra.mxu0 0.0
    %362 = vmatprep.subr.mxu0 0.0
    %363 = vmatpush2.msra.mxu0 0.0
    %364 = vmatprep.subr.mxu0 0.0
    %365 = vmatpush2.msra.mxu0 0.0
    %366 = vmatprep.subr.mxu0 0.0
    %367 = vmatpush2.msra.mxu0 0.0
    %368 = vmatprep.subr.mxu0 0.0
    %369 = vmatpush2.msra.mxu0 0.0
    %370 = vmatprep.subr.mxu0 0.0
    %371 = vmatpush2.msra.mxu0 0.0
    %372 = vmatprep.mubr.f32.mxu0 0.0
    %373 = vmatmul.mubr.f32.gmra.mxu0 %v306
    %v374 = vpop.f32.mrf.mxu0
    %v375 = vadd.f32 %v302, %v374
    %v376 = vpop.f32.mrf.mxu0
    %377 = vdwg.mxu0
    %v378 = vmax.f32 %v375, 0.0
    %v379 = vld [vmem:[#allocation8 + $0x18] sm:$0xff]
    %v380 = vld [vmem:[#allocation8 + $0x70] sm:$0xff]
    %v381 = vld [vmem:[#allocation8 + $0xc8] sm:$0xff]
    %v382 = vld [vmem:[#allocation8 + $0x120] sm:$0xff]
    %v383 = vld [vmem:[#allocation10 + $0x3] sm:$0x1]
    %v385 = vlaneseq
    %v386 = vshrl.u32 %v385, 7
    %v387 = vsub.s32 0, %v386
    %v388 = vrot.slane %v383, %v387
    %vm390 = vcmask 261120
    %v392 = vsel %vm390, %v378, 0
    %394 = vmatprep.subr.mxu0 0.0
    %395 = vmatpush1.msra.mxu0 0.0
    %396 = vmatprep.subr.mxu0 0.0
    %397 = vmatpush1.msra.mxu0 0.0
    %398 = vmatprep.subr.mxu0 0.0
    %399 = vmatpush1.msra.mxu0 0.0
    %400 = vmatprep.subr.mxu0 0.0
    %401 = vmatpush1.msra.mxu0 0.0
    %402 = vmatprep.subr.mxu0 0.0
    %403 = vmatpush1.msra.mxu0 0.0
    %404 = vmatprep.subr.mxu0 0.0
    %405 = vmatpush1.msra.mxu0 0.0
    %406 = vmatprep.subr.mxu0 0.0
    %407 = vmatpush1.msra.mxu0 0.0
    %408 = vmatprep.subr.mxu0 0.0
    %409 = vmatpush1.msra.mxu0 0.0
    %410 = vmatprep.subr.mxu0 0.0
    %411 = vmatpush1.msra.mxu0 0.0
    %412 = vmatprep.subr.mxu0 0.0
    %413 = vmatpush1.msra.mxu0 0.0
    %414 = vmatprep.subr.mxu0 0.0
    %415 = vmatpush1.msra.mxu0 0.0
    %416 = vmatprep.subr.mxu0 0.0
    %417 = vmatpush1.msra.mxu0 0.0
    %418 = vmatprep.subr.mxu0 0.0
    %419 = vmatpush1.msra.mxu0 %v382
    %420 = vmatprep.subr.mxu0 0.0
    %421 = vmatpush1.msra.mxu0 %v381
    %422 = vmatprep.subr.mxu0 0.0
    %423 = vmatpush1.msra.mxu0 %v380
    %424 = vmatprep.subr.mxu0 0.0
    %425 = vmatpush1.msra.mxu0 %v379
    %426 = vmatprep.subr.mxu0 0.0
    %427 = vmatpush2.msra.mxu0 0.0
    %428 = vmatprep.subr.mxu0 0.0
    %429 = vmatpush2.msra.mxu0 0.0
    %430 = vmatprep.subr.mxu0 0.0
    %431 = vmatpush2.msra.mxu0 0.0
    %432 = vmatprep.subr.mxu0 0.0
    %433 = vmatpush2.msra.mxu0 0.0
    %434 = vmatprep.subr.mxu0 0.0
    %435 = vmatpush2.msra.mxu0 0.0
    %436 = vmatprep.subr.mxu0 0.0
    %437 = vmatpush2.msra.mxu0 0.0
    %438 = vmatprep.subr.mxu0 0.0
    %439 = vmatpush2.msra.mxu0 0.0
    %440 = vmatprep.subr.mxu0 0.0
    %441 = vmatpush2.msra.mxu0 0.0
    %442 = vmatprep.subr.mxu0 0.0
    %443 = vmatpush2.msra.mxu0 0.0
    %444 = vmatprep.subr.mxu0 0.0
    %445 = vmatpush2.msra.mxu0 0.0
    %446 = vmatprep.subr.mxu0 0.0
    %447 = vmatpush2.msra.mxu0 0.0
    %448 = vmatprep.subr.mxu0 0.0
    %449 = vmatpush2.msra.mxu0 0.0
    %450 = vmatprep.subr.mxu0 0.0
    %451 = vmatpush2.msra.mxu0 0.0
    %452 = vmatprep.subr.mxu0 0.0
    %453 = vmatpush2.msra.mxu0 0.0
    %454 = vmatprep.subr.mxu0 0.0
    %455 = vmatpush2.msra.mxu0 0.0
    %456 = vmatprep.subr.mxu0 0.0
    %457 = vmatpush2.msra.mxu0 0.0
    %458 = vmatprep.mubr.f32.mxu0 0.0
    %459 = vmatmul.mubr.f32.gmra.mxu0 %v392
    %v460 = vpop.f32.mrf.mxu0
    %v461 = vadd.f32 %v388, %v460
    %v462 = vpop.f32.mrf.mxu0
    %463 = vdwg.mxu0
    %v464 = vmax.f32 %v461, 0.0
    %v465 = vld [vmem:[#allocation8 + $0x20] sm:$0xff]
    %v466 = vld [vmem:[#allocation8 + $0x78] sm:$0xff]
    %v467 = vld [vmem:[#allocation10 + $0x4] sm:$0x1]
    %v469 = vlaneseq
    %v470 = vshrl.u32 %v469, 7
    %v471 = vsub.s32 0, %v470
    %v472 = vrot.slane %v467, %v471
    %vm474 = vcmask 130048
    %v476 = vsel %vm474, %v464, 0
    %478 = vmatprep.subr.mxu0 0.0
    %479 = vmatpush1.msra.mxu0 0.0
    %480 = vmatprep.subr.mxu0 0.0
    %481 = vmatpush1.msra.mxu0 0.0
    %482 = vmatprep.subr.mxu0 0.0
    %483 = vmatpush1.msra.mxu0 0.0
    %484 = vmatprep.subr.mxu0 0.0
    %485 = vmatpush1.msra.mxu0 0.0
    %486 = vmatprep.subr.mxu0 0.0
    %487 = vmatpush1.msra.mxu0 0.0
    %488 = vmatprep.subr.mxu0 0.0
    %489 = vmatpush1.msra.mxu0 0.0
    %490 = vmatprep.subr.mxu0 0.0
    %491 = vmatpush1.msra.mxu0 0.0
    %492 = vmatprep.subr.mxu0 0.0
    %493 = vmatpush1.msra.mxu0 0.0
    %494 = vmatprep.subr.mxu0 0.0
    %495 = vmatpush1.msra.mxu0 0.0
    %496 = vmatprep.subr.mxu0 0.0
    %497 = vmatpush1.msra.mxu0 0.0
    %498 = vmatprep.subr.mxu0 0.0
    %499 = vmatpush1.msra.mxu0 0.0
    %500 = vmatprep.subr.mxu0 0.0
    %501 = vmatpush1.msra.mxu0 0.0
    %502 = vmatprep.subr.mxu0 0.0
    %503 = vmatpush1.msra.mxu0 0.0
    %504 = vmatprep.subr.mxu0 0.0
    %505 = vmatpush1.msra.mxu0 0.0
    %506 = vmatprep.subr.mxu0 0.0
    %507 = vmatpush1.msra.mxu0 %v466
    %508 = vmatprep.subr.mxu0 0.0
    %509 = vmatpush1.msra.mxu0 %v465
    %510 = vmatprep.subr.mxu0 0.0
    %511 = vmatpush2.msra.mxu0 0.0
    %512 = vmatprep.subr.mxu0 0.0
    %513 = vmatpush2.msra.mxu0 0.0
    %514 = vmatprep.subr.mxu0 0.0
    %515 = vmatpush2.msra.mxu0 0.0
    %516 = vmatprep.subr.mxu0 0.0
    %517 = vmatpush2.msra.mxu0 0.0
    %518 = vmatprep.subr.mxu0 0.0
    %519 = vmatpush2.msra.mxu0 0.0
    %520 = vmatprep.subr.mxu0 0.0
    %521 = vmatpush2.msra.mxu0 0.0
    %522 = vmatprep.subr.mxu0 0.0
    %523 = vmatpush2.msra.mxu0 0.0
    %524 = vmatprep.subr.mxu0 0.0
    %525 = vmatpush2.msra.mxu0 0.0
    %526 = vmatprep.subr.mxu0 0.0
    %527 = vmatpush2.msra.mxu0 0.0
    %528 = vmatprep.subr.mxu0 0.0
    %529 = vmatpush2.msra.mxu0 0.0
    %530 = vmatprep.subr.mxu0 0.0
    %531 = vmatpush2.msra.mxu0 0.0
    %532 = vmatprep.subr.mxu0 0.0
    %533 = vmatpush2.msra.mxu0 0.0
    %534 = vmatprep.subr.mxu0 0.0
    %535 = vmatpush2.msra.mxu0 0.0
    %536 = vmatprep.subr.mxu0 0.0
    %537 = vmatpush2.msra.mxu0 0.0
    %538 = vmatprep.subr.mxu0 0.0
    %539 = vmatpush2.msra.mxu0 0.0
    %540 = vmatprep.subr.mxu0 0.0
    %541 = vmatpush2.msra.mxu0 0.0
    %542 = vmatprep.mubr.f32.mxu0 0.0
    %543 = vmatmul.mubr.f32.gmra.mxu0 %v476
    %v544 = vpop.f32.mrf.mxu0
    %v545 = vadd.f32 %v472, %v544
    %v546 = vpop.f32.mrf.mxu0
    %547 = vdwg.mxu0
    %548 = vst [vmem:[#allocation11] sm:$0xf] %v545
    %v549 = vld [vmem:[#allocation8 + $0x28] sm:$0xff]
    %v550 = vld [vmem:[#allocation8 + $0x80] sm:$0xff]
    %v551 = vld [vmem:[#allocation8 + $0xd8] sm:$0xff]
    %v552 = vld [vmem:[#allocation8 + $0x130] sm:$0xff]
    %v553 = vld [vmem:[#allocation8 + $0x188] sm:$0xff]
    %v554 = vld [vmem:[#allocation8 + $0x1e0] sm:$0xff]
    %v555 = vld [vmem:[#allocation8 + $0x238] sm:$0xff]
    %v556 = vld [vmem:[#allocation8 + $0x290] sm:$0xff]
    %v557 = vld [vmem:[#allocation8 + $0x2e8] sm:$0xff]
    %v558 = vld [vmem:[#allocation8 + $0x340] sm:$0xff]
    %v559 = vld [vmem:[#allocation8 + $0x398] sm:$0xff]
    %v560 = vld [vmem:[#allocation8 + $0x3f0] sm:$0xff]
    %v561 = vld [vmem:[#allocation8 + $0x448] sm:$0xff]
    %v562 = vld [vmem:[#allocation8 + $0x4a0] sm:$0xff]
    %v563 = vld [vmem:[#allocation8 + $0x4f8] sm:$0xff]
    %v564 = vld [vmem:[#allocation8 + $0x550] sm:$0xff]
    %v565 = vld [vmem:[#allocation10 + $0x5] sm:$0x1]
    %v567 = vlaneseq
    %v568 = vshrl.u32 %v567, 7
    %v569 = vsub.s32 0, %v568
    %v570 = vrot.slane %v565, %v569
    %572 = vmatprep.subr.mxu0 0.0
    %573 = vmatpush1.msra.mxu0 %v564
    %574 = vmatprep.subr.mxu0 0.0
    %575 = vmatpush1.msra.mxu0 %v563
    %576 = vmatprep.subr.mxu0 0.0
    %577 = vmatpush1.msra.mxu0 %v562
    %578 = vmatprep.subr.mxu0 0.0
    %579 = vmatpush1.msra.mxu0 %v561
    %580 = vmatprep.subr.mxu0 0.0
    %581 = vmatpush1.msra.mxu0 %v560
    %582 = vmatprep.subr.mxu0 0.0
    %583 = vmatpush1.msra.mxu0 %v559
    %584 = vmatprep.subr.mxu0 0.0
    %585 = vmatpush1.msra.mxu0 %v558
    %586 = vmatprep.subr.mxu0 0.0
    %587 = vmatpush1.msra.mxu0 %v557
    %588 = vmatprep.subr.mxu0 0.0
    %589 = vmatpush1.msra.mxu0 %v556
    %590 = vmatprep.subr.mxu0 0.0
    %591 = vmatpush1.msra.mxu0 %v555
    %592 = vmatprep.subr.mxu0 0.0
    %593 = vmatpush1.msra.mxu0 %v554
    %594 = vmatprep.subr.mxu0 0.0
    %595 = vmatpush1.msra.mxu0 %v553
    %596 = vmatprep.subr.mxu0 0.0
    %597 = vmatpush1.msra.mxu0 %v552
    %598 = vmatprep.subr.mxu0 0.0
    %599 = vmatpush1.msra.mxu0 %v551
    %600 = vmatprep.subr.mxu0 0.0
    %601 = vmatpush1.msra.mxu0 %v550
    %602 = vmatprep.subr.mxu0 0.0
    %603 = vmatpush1.msra.mxu0 %v549
    %604 = vmatprep.subr.mxu0 0.0
    %605 = vmatpush2.msra.mxu0 0.0
    %606 = vmatprep.subr.mxu0 0.0
    %607 = vmatpush2.msra.mxu0 0.0
    %608 = vmatprep.subr.mxu0 0.0
    %609 = vmatpush2.msra.mxu0 0.0
    %610 = vmatprep.subr.mxu0 0.0
    %611 = vmatpush2.msra.mxu0 0.0
    %612 = vmatprep.subr.mxu0 0.0
    %613 = vmatpush2.msra.mxu0 0.0
    %614 = vmatprep.subr.mxu0 0.0
    %615 = vmatpush2.msra.mxu0 0.0
    %616 = vmatprep.subr.mxu0 0.0
    %617 = vmatpush2.msra.mxu0 0.0
    %618 = vmatprep.subr.mxu0 0.0
    %619 = vmatpush2.msra.mxu0 0.0
    %620 = vmatprep.subr.mxu0 0.0
    %621 = vmatpush2.msra.mxu0 0.0
    %622 = vmatprep.subr.mxu0 0.0
    %623 = vmatpush2.msra.mxu0 0.0
    %624 = vmatprep.subr.mxu0 0.0
    %625 = vmatpush2.msra.mxu0 0.0
    %626 = vmatprep.subr.mxu0 0.0
    %627 = vmatpush2.msra.mxu0 0.0
    %628 = vmatprep.subr.mxu0 0.0
    %629 = vmatpush2.msra.mxu0 0.0
    %630 = vmatprep.subr.mxu0 0.0
    %631 = vmatpush2.msra.mxu0 0.0
    %632 = vmatprep.subr.mxu0 0.0
    %633 = vmatpush2.msra.mxu0 0.0
    %634 = vmatprep.subr.mxu0 0.0
    %635 = vmatpush2.msra.mxu0 0.0
    %636 = vmatprep.mubr.f32.mxu0 0.0
    %637 = vmatmul.mubr.f32.gmra.mxu0 %v545
    %v638 = vpop.f32.mrf.mxu0
    %v639 = vadd.f32 %v570, %v638
    %v640 = vpop.f32.mrf.mxu0
    %641 = vdwg.mxu0
    %v642 = vmax.f32 %v639, 0.0
    %v643 = vld [vmem:[#allocation8 + $0x30] sm:$0xff]
    %v644 = vld [vmem:[#allocation8 + $0x88] sm:$0xff]
    %v645 = vld [vmem:[#allocation10 + $0x6] sm:$0x1]
    %v647 = vlaneseq
    %v648 = vshrl.u32 %v647, 7
    %v649 = vsub.s32 0, %v648
    %v650 = vrot.slane %v645, %v649
    %v653 = vsel %vm474, %v642, 0
    %655 = vmatprep.subr.mxu0 0.0
    %656 = vmatpush1.msra.mxu0 0.0
    %657 = vmatprep.subr.mxu0 0.0
    %658 = vmatpush1.msra.mxu0 0.0
    %659 = vmatprep.subr.mxu0 0.0
    %660 = vmatpush1.msra.mxu0 0.0
    %661 = vmatprep.subr.mxu0 0.0
    %662 = vmatpush1.msra.mxu0 0.0
    %663 = vmatprep.subr.mxu0 0.0
    %664 = vmatpush1.msra.mxu0 0.0
    %665 = vmatprep.subr.mxu0 0.0
    %666 = vmatpush1.msra.mxu0 0.0
    %667 = vmatprep.subr.mxu0 0.0
    %668 = vmatpush1.msra.mxu0 0.0
    %669 = vmatprep.subr.mxu0 0.0
    %670 = vmatpush1.msra.mxu0 0.0
    %671 = vmatprep.subr.mxu0 0.0
    %672 = vmatpush1.msra.mxu0 0.0
    %673 = vmatprep.subr.mxu0 0.0
    %674 = vmatpush1.msra.mxu0 0.0
    %675 = vmatprep.subr.mxu0 0.0
    %676 = vmatpush1.msra.mxu0 0.0
    %677 = vmatprep.subr.mxu0 0.0
    %678 = vmatpush1.msra.mxu0 0.0
    %679 = vmatprep.subr.mxu0 0.0
    %680 = vmatpush1.msra.mxu0 0.0
    %681 = vmatprep.subr.mxu0 0.0
    %682 = vmatpush1.msra.mxu0 0.0
    %683 = vmatprep.subr.mxu0 0.0
    %684 = vmatpush1.msra.mxu0 %v644
    %685 = vmatprep.subr.mxu0 0.0
    %686 = vmatpush1.msra.mxu0 %v643
    %687 = vmatprep.subr.mxu0 0.0
    %688 = vmatpush2.msra.mxu0 0.0
    %689 = vmatprep.subr.mxu0 0.0
    %690 = vmatpush2.msra.mxu0 0.0
    %691 = vmatprep.subr.mxu0 0.0
    %692 = vmatpush2.msra.mxu0 0.0
    %693 = vmatprep.subr.mxu0 0.0
    %694 = vmatpush2.msra.mxu0 0.0
    %695 = vmatprep.subr.mxu0 0.0
    %696 = vmatpush2.msra.mxu0 0.0
    %697 = vmatprep.subr.mxu0 0.0
    %698 = vmatpush2.msra.mxu0 0.0
    %699 = vmatprep.subr.mxu0 0.0
    %700 = vmatpush2.msra.mxu0 0.0
    %701 = vmatprep.subr.mxu0 0.0
    %702 = vmatpush2.msra.mxu0 0.0
    %703 = vmatprep.subr.mxu0 0.0
    %704 = vmatpush2.msra.mxu0 0.0
    %705 = vmatprep.subr.mxu0 0.0
    %706 = vmatpush2.msra.mxu0 0.0
    %707 = vmatprep.subr.mxu0 0.0
    %708 = vmatpush2.msra.mxu0 0.0
    %709 = vmatprep.subr.mxu0 0.0
    %710 = vmatpush2.msra.mxu0 0.0
    %711 = vmatprep.subr.mxu0 0.0
    %712 = vmatpush2.msra.mxu0 0.0
    %713 = vmatprep.subr.mxu0 0.0
    %714 = vmatpush2.msra.mxu0 0.0
    %715 = vmatprep.subr.mxu0 0.0
    %716 = vmatpush2.msra.mxu0 0.0
    %717 = vmatprep.subr.mxu0 0.0
    %718 = vmatpush2.msra.mxu0 0.0
    %719 = vmatprep.mubr.f32.mxu0 0.0
    %720 = vmatmul.mubr.f32.gmra.mxu0 %v653
    %v721 = vpop.f32.mrf.mxu0
    %v722 = vadd.f32 %v650, %v721
    %v723 = vpop.f32.mrf.mxu0
    %724 = vdwg.mxu0
    %v725 = vmax.f32 %v722, 0.0
    %v726 = vld [vmem:[#allocation8 + $0x38] sm:$0xff]
    %v727 = vld [vmem:[#allocation8 + $0x90] sm:$0xff]
    %v728 = vld [vmem:[#allocation8 + $0xe8] sm:$0xff]
    %v729 = vld [vmem:[#allocation8 + $0x140] sm:$0xff]
    %v730 = vld [vmem:[#allocation10 + $0x7] sm:$0x1]
    %v732 = vlaneseq
    %v733 = vshrl.u32 %v732, 7
    %v734 = vsub.s32 0, %v733
    %v735 = vrot.slane %v730, %v734
    %v738 = vsel %vm390, %v725, 0
    %740 = vmatprep.subr.mxu0 0.0
    %741 = vmatpush1.msra.mxu0 0.0
    %742 = vmatprep.subr.mxu0 0.0
    %743 = vmatpush1.msra.mxu0 0.0
    %744 = vmatprep.subr.mxu0 0.0
    %745 = vmatpush1.msra.mxu0 0.0
    %746 = vmatprep.subr.mxu0 0.0
    %747 = vmatpush1.msra.mxu0 0.0
    %748 = vmatprep.subr.mxu0 0.0
    %749 = vmatpush1.msra.mxu0 0.0
    %750 = vmatprep.subr.mxu0 0.0
    %751 = vmatpush1.msra.mxu0 0.0
    %752 = vmatprep.subr.mxu0 0.0
    %753 = vmatpush1.msra.mxu0 0.0
    %754 = vmatprep.subr.mxu0 0.0
    %755 = vmatpush1.msra.mxu0 0.0
    %756 = vmatprep.subr.mxu0 0.0
    %757 = vmatpush1.msra.mxu0 0.0
    %758 = vmatprep.subr.mxu0 0.0
    %759 = vmatpush1.msra.mxu0 0.0
    %760 = vmatprep.subr.mxu0 0.0
    %761 = vmatpush1.msra.mxu0 0.0
    %762 = vmatprep.subr.mxu0 0.0
    %763 = vmatpush1.msra.mxu0 0.0
    %764 = vmatprep.subr.mxu0 0.0
    %765 = vmatpush1.msra.mxu0 %v729
    %766 = vmatprep.subr.mxu0 0.0
    %767 = vmatpush1.msra.mxu0 %v728
    %768 = vmatprep.subr.mxu0 0.0
    %769 = vmatpush1.msra.mxu0 %v727
    %770 = vmatprep.subr.mxu0 0.0
    %771 = vmatpush1.msra.mxu0 %v726
    %772 = vmatprep.subr.mxu0 0.0
    %773 = vmatpush2.msra.mxu0 0.0
    %774 = vmatprep.subr.mxu0 0.0
    %775 = vmatpush2.msra.mxu0 0.0
    %776 = vmatprep.subr.mxu0 0.0
    %777 = vmatpush2.msra.mxu0 0.0
    %778 = vmatprep.subr.mxu0 0.0
    %779 = vmatpush2.msra.mxu0 0.0
    %780 = vmatprep.subr.mxu0 0.0
    %781 = vmatpush2.msra.mxu0 0.0
    %782 = vmatprep.subr.mxu0 0.0
    %783 = vmatpush2.msra.mxu0 0.0
    %784 = vmatprep.subr.mxu0 0.0
    %785 = vmatpush2.msra.mxu0 0.0
    %786 = vmatprep.subr.mxu0 0.0
    %787 = vmatpush2.msra.mxu0 0.0
    %788 = vmatprep.subr.mxu0 0.0
    %789 = vmatpush2.msra.mxu0 0.0
    %790 = vmatprep.subr.mxu0 0.0
    %791 = vmatpush2.msra.mxu0 0.0
    %792 = vmatprep.subr.mxu0 0.0
    %793 = vmatpush2.msra.mxu0 0.0
    %794 = vmatprep.subr.mxu0 0.0
    %795 = vmatpush2.msra.mxu0 0.0
    %796 = vmatprep.subr.mxu0 0.0
    %797 = vmatpush2.msra.mxu0 0.0
    %798 = vmatprep.subr.mxu0 0.0
    %799 = vmatpush2.msra.mxu0 0.0
    %800 = vmatprep.subr.mxu0 0.0
    %801 = vmatpush2.msra.mxu0 0.0
    %802 = vmatprep.subr.mxu0 0.0
    %803 = vmatpush2.msra.mxu0 0.0
    %804 = vmatprep.mubr.f32.mxu0 0.0
    %805 = vmatmul.mubr.f32.gmra.mxu0 %v738
    %v806 = vpop.f32.mrf.mxu0
    %v807 = vadd.f32 %v735, %v806
    %v808 = vpop.f32.mrf.mxu0
    %809 = vdwg.mxu0
    %v810 = vmax.f32 %v807, 0.0
    %v811 = vld [vmem:[#allocation8 + $0x40] sm:$0xff]
    %v812 = vld [vmem:[#allocation8 + $0x98] sm:$0xff]
    %v813 = vld [vmem:[#allocation8 + $0xf0] sm:$0xff]
    %v814 = vld [vmem:[#allocation8 + $0x148] sm:$0xff]
    %v815 = vld [vmem:[#allocation8 + $0x1a0] sm:$0xff]
    %v816 = vld [vmem:[#allocation8 + $0x1f8] sm:$0xff]
    %v817 = vld [vmem:[#allocation10 + $0x8] sm:$0x1]
    %v819 = vlaneseq
    %v820 = vshrl.u32 %v819, 7
    %v821 = vsub.s32 0, %v820
    %v822 = vrot.slane %v817, %v821
    %v825 = vsel %vm304, %v810, 0
    %827 = vmatprep.subr.mxu0 0.0
    %828 = vmatpush1.msra.mxu0 0.0
    %829 = vmatprep.subr.mxu0 0.0
    %830 = vmatpush1.msra.mxu0 0.0
    %831 = vmatprep.subr.mxu0 0.0
    %832 = vmatpush1.msra.mxu0 0.0
    %833 = vmatprep.subr.mxu0 0.0
    %834 = vmatpush1.msra.mxu0 0.0
    %835 = vmatprep.subr.mxu0 0.0
    %836 = vmatpush1.msra.mxu0 0.0
    %837 = vmatprep.subr.mxu0 0.0
    %838 = vmatpush1.msra.mxu0 0.0
    %839 = vmatprep.subr.mxu0 0.0
    %840 = vmatpush1.msra.mxu0 0.0
    %841 = vmatprep.subr.mxu0 0.0
    %842 = vmatpush1.msra.mxu0 0.0
    %843 = vmatprep.subr.mxu0 0.0
    %844 = vmatpush1.msra.mxu0 0.0
    %845 = vmatprep.subr.mxu0 0.0
    %846 = vmatpush1.msra.mxu0 0.0
    %847 = vmatprep.subr.mxu0 0.0
    %848 = vmatpush1.msra.mxu0 %v816
    %849 = vmatprep.subr.mxu0 0.0
    %850 = vmatpush1.msra.mxu0 %v815
    %851 = vmatprep.subr.mxu0 0.0
    %852 = vmatpush1.msra.mxu0 %v814
    %853 = vmatprep.subr.mxu0 0.0
    %854 = vmatpush1.msra.mxu0 %v813
    %855 = vmatprep.subr.mxu0 0.0
    %856 = vmatpush1.msra.mxu0 %v812
    %857 = vmatprep.subr.mxu0 0.0
    %858 = vmatpush1.msra.mxu0 %v811
    %859 = vmatprep.subr.mxu0 0.0
    %860 = vmatpush2.msra.mxu0 0.0
    %861 = vmatprep.subr.mxu0 0.0
    %862 = vmatpush2.msra.mxu0 0.0
    %863 = vmatprep.subr.mxu0 0.0
    %864 = vmatpush2.msra.mxu0 0.0
    %865 = vmatprep.subr.mxu0 0.0
    %866 = vmatpush2.msra.mxu0 0.0
    %867 = vmatprep.subr.mxu0 0.0
    %868 = vmatpush2.msra.mxu0 0.0
    %869 = vmatprep.subr.mxu0 0.0
    %870 = vmatpush2.msra.mxu0 0.0
    %871 = vmatprep.subr.mxu0 0.0
    %872 = vmatpush2.msra.mxu0 0.0
    %873 = vmatprep.subr.mxu0 0.0
    %874 = vmatpush2.msra.mxu0 0.0
    %875 = vmatprep.subr.mxu0 0.0
    %876 = vmatpush2.msra.mxu0 0.0
    %877 = vmatprep.subr.mxu0 0.0
    %878 = vmatpush2.msra.mxu0 0.0
    %879 = vmatprep.subr.mxu0 0.0
    %880 = vmatpush2.msra.mxu0 0.0
    %881 = vmatprep.subr.mxu0 0.0
    %882 = vmatpush2.msra.mxu0 0.0
    %883 = vmatprep.subr.mxu0 0.0
    %884 = vmatpush2.msra.mxu0 0.0
    %885 = vmatprep.subr.mxu0 0.0
    %886 = vmatpush2.msra.mxu0 0.0
    %887 = vmatprep.subr.mxu0 0.0
    %888 = vmatpush2.msra.mxu0 0.0
    %889 = vmatprep.subr.mxu0 0.0
    %890 = vmatpush2.msra.mxu0 0.0
    %891 = vmatprep.mubr.f32.mxu0 0.0
    %892 = vmatmul.mubr.f32.gmra.mxu0 %v825
    %v893 = vpop.f32.mrf.mxu0
    %v894 = vadd.f32 %v822, %v893
    %v895 = vpop.f32.mrf.mxu0
    %896 = vdwg.mxu0
    %v897 = vmax.f32 %v894, 0.0
    %v898 = vld [vmem:[#allocation8 + $0x48] sm:$0xff]
    %v899 = vld [vmem:[#allocation8 + $0x50] sm:$0xff]
    %v900 = vld [vmem:[#allocation8 + $0xa0] sm:$0xff]
    %v901 = vld [vmem:[#allocation8 + $0xa8] sm:$0xff]
    %v902 = vld [vmem:[#allocation8 + $0xf8] sm:$0xff]
    %v903 = vld [vmem:[#allocation8 + $0x100] sm:$0xff]
    %v904 = vld [vmem:[#allocation8 + $0x150] sm:$0xff]
    %v905 = vld [vmem:[#allocation8 + $0x158] sm:$0xff]
    %v906 = vld [vmem:[#allocation8 + $0x1a8] sm:$0xff]
    %v907 = vld [vmem:[#allocation8 + $0x1b0] sm:$0xff]
    %v908 = vld [vmem:[#allocation8 + $0x200] sm:$0xff]
    %v909 = vld [vmem:[#allocation8 + $0x208] sm:$0xff]
    %v910 = vld [vmem:[#allocation8 + $0x258] sm:$0xff]
    %v911 = vld [vmem:[#allocation8 + $0x260] sm:$0xff]
    %v912 = vld [vmem:[#allocation8 + $0x2b0] sm:$0xff]
    %v913 = vld [vmem:[#allocation8 + $0x2b8] sm:$0xff]
    %v914 = vld [vmem:[#allocation8 + $0x308] sm:$0xff]
    %v915 = vld [vmem:[#allocation8 + $0x310] sm:$0xff]
    %v916 = vld [vmem:[#allocation8 + $0x360] sm:$0xff]
    %v917 = vld [vmem:[#allocation8 + $0x368] sm:$0xff]
    %v918 = vld [vmem:[#allocation8 + $0x3b8] sm:$0xff]
    %v919 = vld [vmem:[#allocation8 + $0x3c0] sm:$0xff]
    %v920 = vld [vmem:[#allocation8 + $0x410] sm:$0xff]
    %v921 = vld [vmem:[#allocation8 + $0x418] sm:$0xff]
    %v922 = vld [vmem:[#allocation10 + $0x9] sm:$0x3]
    %v924 = vlaneseq
    %v925 = vshrl.u32 %v924, 7
    %v926 = vsub.s32 0, %v925
    %v927 = vrot.slane %v922, %v926
    %v928 = vlaneseq
    %v929 = vshrl.u32 %v928, 7
    %v930 = vsub.s32 1, %v929
    %v931 = vrot.slane %v922, %v930
    %v935 = vsel %vm216, %v897, 0
    %937 = vmatprep.subr.mxu0 0.0
    %938 = vmatpush1.msra.mxu0 0.0
    %939 = vmatprep.subr.mxu0 0.0
    %940 = vmatpush1.msra.mxu0 0.0
    %941 = vmatprep.subr.mxu0 0.0
    %942 = vmatpush1.msra.mxu0 0.0
    %943 = vmatprep.subr.mxu0 0.0
    %944 = vmatpush1.msra.mxu0 0.0
    %945 = vmatprep.subr.mxu0 %v921
    %946 = vmatpush1.msra.mxu0 %v920
    %947 = vmatprep.subr.mxu0 %v919
    %948 = vmatpush1.msra.mxu0 %v918
    %949 = vmatprep.subr.mxu0 %v917
    %950 = vmatpush1.msra.mxu0 %v916
    %951 = vmatprep.subr.mxu0 %v915
    %952 = vmatpush1.msra.mxu0 %v914
    %953 = vmatprep.subr.mxu0 %v913
    %954 = vmatpush1.msra.mxu0 %v912
    %955 = vmatprep.subr.mxu0 %v911
    %956 = vmatpush1.msra.mxu0 %v910
    %957 = vmatprep.subr.mxu0 %v909
    %958 = vmatpush1.msra.mxu0 %v908
    %959 = vmatprep.subr.mxu0 %v907
    %960 = vmatpush1.msra.mxu0 %v906
    %961 = vmatprep.subr.mxu0 %v905
    %962 = vmatpush1.msra.mxu0 %v904
    %963 = vmatprep.subr.mxu0 %v903
    %964 = vmatpush1.msra.mxu0 %v902
    %965 = vmatprep.subr.mxu0 %v901
    %966 = vmatpush1.msra.mxu0 %v900
    %967 = vmatprep.subr.mxu0 %v899
    %968 = vmatpush1.msra.mxu0 %v898
    %969 = vmatprep.subr.mxu0 0.0
    %970 = vmatpush2.msra.mxu0 0.0
    %971 = vmatprep.subr.mxu0 0.0
    %972 = vmatpush2.msra.mxu0 0.0
    %973 = vmatprep.subr.mxu0 0.0
    %974 = vmatpush2.msra.mxu0 0.0
    %975 = vmatprep.subr.mxu0 0.0
    %976 = vmatpush2.msra.mxu0 0.0
    %977 = vmatprep.subr.mxu0 0.0
    %978 = vmatpush2.msra.mxu0 0.0
    %979 = vmatprep.subr.mxu0 0.0
    %980 = vmatpush2.msra.mxu0 0.0
    %981 = vmatprep.subr.mxu0 0.0
    %982 = vmatpush2.msra.mxu0 0.0
    %983 = vmatprep.subr.mxu0 0.0
    %984 = vmatpush2.msra.mxu0 0.0
    %985 = vmatprep.subr.mxu0 0.0
    %986 = vmatpush2.msra.mxu0 0.0
    %987 = vmatprep.subr.mxu0 0.0
    %988 = vmatpush2.msra.mxu0 0.0
    %989 = vmatprep.subr.mxu0 0.0
    %990 = vmatpush2.msra.mxu0 0.0
    %991 = vmatprep.subr.mxu0 0.0
    %992 = vmatpush2.msra.mxu0 0.0
    %993 = vmatprep.subr.mxu0 0.0
    %994 = vmatpush2.msra.mxu0 0.0
    %995 = vmatprep.subr.mxu0 0.0
    %996 = vmatpush2.msra.mxu0 0.0
    %997 = vmatprep.subr.mxu0 0.0
    %998 = vmatpush2.msra.mxu0 0.0
    %999 = vmatprep.subr.mxu0 0.0
    %1000 = vmatpush2.msra.mxu0 0.0
    %1001 = vmatprep.mubr.f32.mxu0 0.0
    %1002 = vmatmul.mubr.f32.gmra.mxu0 %v935
    %v1003 = vpop.f32.mrf.mxu0
    %v1004 = vadd.f32 %v927, %v1003
    %v1005 = vpop.f32.mrf.mxu0
    %v1006 = vadd.f32 %v931, %v1005
    %1007 = vdwg.mxu0
    %v1010 = vcombine.low %v1004, %v1006
    %vm1012 = vcmask 1043456
    %vm1013 = vcmask 523268
    %vm1014 = vmor %vm1013, %vm1012
    %1015 = vst.msk [vmem:[%s5] sm:$0xff] %vm1014, %v1010
    // Predicated region
    $region42: #{_forward.1} parent=1 // pred_check
      _
    $region43: #{_forward.1} parent=1 // pred_check_branch
      %1017 = sbr.rel (0) target = $region45
    $region44: #{_forward.1} parent=1 // pred_region
      _
    $region45: #{_forward.1} parent=1 // pred_fallthru
      _
    // Predicated region
    $region46: #{_forward.1} parent=1 // pred_check
      _
    $region47: #{_forward.1} parent=1 // pred_check_branch
      %1019 = sbr.rel (0) target = $region49
    $region48: #{_forward.1} parent=1 // pred_region
      %s1021 = ssub.s32 64, 64
      %1022 = vsyncadd [#allocation4], %s1021
      %s1024 = sshll.u32 [#allocation11], 4
      %s1025 = int_to_ptr.vmem [resolvable:$true] %s1024
      %1027 = dma.vmem_to_hbm [thread:$0]  %s1025, 64, %s6, [#allocation4]
    $region49: #{_forward.1} parent=1 // pred_fallthru
      _
    // Predicated region
    $region50: #{_forward.1} parent=1 // pred_check
      _
    $region51: #{_forward.1} parent=1 // pred_check_branch
      %1029 = sbr.rel (0) target = $region53
    $region52: #{_forward.1} parent=1 // pred_region
      _
    $region53: #{_forward.1} parent=1 // pred_fallthru
      _
    // Predicated region
    $region54: #{_forward.1} parent=1 // pred_check
      _
    $region55: #{_forward.1} parent=1 // pred_check_branch
      %1031 = sbr.rel (0) target = $region57
    $region56: #{_forward.1} parent=1 // pred_region
      %1032 = dma.done [#allocation4], 64
    $region57: #{_forward.1} parent=1 // pred_fallthru
      _
    %1033 = vsyncpa [#allocation3], 1
    %1034 = vsyncpa [#allocation6], 1
    %1035 = vsyncpa [#allocation9], 1
    %1036 = vsyncpa [#allocation4], 1

</llo_original>
